<compile_context>
chip_gen: v5e
topology: v5e:2x2
jax: 0.10.0
libtpu: 0.0.40
codegen_flags: <defaults>
</compile_context>

<pallas_src>
import jax
import jax.numpy as jnp
from jax.experimental import pallas as pl
from jax.experimental.pallas import tpu as pltpu


# Per-block VMEM budget.  With default double-buffering the pipeline holds
# roughly 2 x (input + output) blocks, i.e. ~4x this, safe on every generation.
_MAX_BLOCK_BYTES = 2 * 1024 * 1024


def _scale_relu_kernel(x_ref, w_ref, b_ref, o_ref):
    x = x_ref[...]                      # (R, Cb)
    y = x * w_ref[...] + b_ref[...]     # (R, 1) broadcasts across lanes
    o_ref[...] = jnp.maximum(y, 0).astype(o_ref.dtype)


def scale_relu(x, weight, bias=None):
    """relu(x * weight + bias) with NCHW x and (1, C, 1, 1) weight/bias."""
    B, C, H, W = x.shape
    rows, cols = B * C, H * W
    dtype = x.dtype
    itemsize = jnp.dtype(dtype).itemsize

    # Free reshape: NCHW is row-major contiguous, so (B*C, H*W) costs nothing.
    x2d = jnp.reshape(x, (rows, cols))

    # Per-row scale / bias: row r = (batch b, channel c) uses weight[c].
    w_rows = jnp.broadcast_to(jnp.reshape(weight, (1, C)), (B, C))
    w_rows = jnp.reshape(w_rows, (rows, 1)).astype(dtype)
    if bias is None:
        b_rows = jnp.zeros((rows, 1), dtype=dtype)
    else:
        b_rows = jnp.broadcast_to(jnp.reshape(bias, (1, C)), (B, C))
        b_rows = jnp.reshape(b_rows, (rows, 1)).astype(dtype)

    # Dtype-aware sublane packing: 8 rows for f32, 16 for bf16, 32 for int8.
    pack = max(8, 32 // itemsize)

    # Lane (last-dim) blocking: keep the full width (lane-dense, unmasked
    # stores) unless even a `pack`-row strip blows the VMEM budget and the
    # width splits cleanly along 128-lane boundaries.
    block_cols = cols
    if cols % 128 == 0:
        while (pack * block_cols * itemsize > _MAX_BLOCK_BYTES
               and block_cols % 256 == 0):
            block_cols //= 2

    # Row blocking: as many `pack`-row groups as fit the per-block budget.
    budget_rows = max(
        pack, (_MAX_BLOCK_BYTES // (block_cols * itemsize)) // pack * pack)
    block_rows = rows if rows <= budget_rows else budget_rows

    grid = (pl.cdiv(rows, block_rows), pl.cdiv(cols, block_cols))

    out2d = pl.pallas_call(
        _scale_relu_kernel,
        out_shape=jax.ShapeDtypeStruct((rows, cols), dtype),
        grid_spec=pltpu.PrefetchScalarGridSpec(
            num_scalar_prefetch=0,
            grid=grid,
            in_specs=[
                pl.BlockSpec((block_rows, block_cols), lambda i, j: (i, j)),
                pl.BlockSpec((block_rows, 1), lambda i, j: (i, 0)),
                pl.BlockSpec((block_rows, 1), lambda i, j: (i, 0)),
            ],
            out_specs=pl.BlockSpec((block_rows, block_cols), lambda i, j: (i, j)),
        ),
        compiler_params=pltpu.CompilerParams(
            dimension_semantics=("parallel", "parallel")),
    )(x2d, w_rows, b_rows)

    return jnp.reshape(out2d, (B, C, H, W))


def scale_relu_ref(x, weight, bias=None):
    """Pure-JAX reference matching the PyTorch ScaleReLU forward exactly."""
    y = x * weight
    if bias is not None:
        y = y + bias
    return jnp.maximum(y, 0)


if __name__ == "__main__":
    key = jax.random.PRNGKey(0)
    kx, kw, kb = jax.random.split(key, 3)
    B, C, H, W = 2, 4, 16, 16
    x = jax.random.normal(kx, (B, C, H, W), dtype=jnp.float32) * 3.0
    # Non-trivial per-channel scale/bias to exercise the broadcast
    # (the module's default init is weight=1, bias=0, which is too easy).
    weight = jax.random.normal(kw, (1, C, 1, 1), dtype=jnp.float32) + 1.0
    bias = jax.random.normal(kb, (1, C, 1, 1), dtype=jnp.float32) * 0.5

    y = scale_relu(x, weight, bias)
    y = jax.block_until_ready(y)

    y_ref = scale_relu_ref(x, weight, bias)
    assert y.shape == x.shape and y.dtype == x.dtype
    assert jnp.allclose(y, y_ref, atol=1e-6, rtol=1e-6), "mismatch vs reference"

    print("KERNEL_OK")
</pallas_src>

<mosaic_0001>
module attributes {stable_mosaic.version = 11 : i64} {
  func.func @_scale_relu_kernel(%arg0: i32, %arg1: i32, %arg2: memref<8x256xf32, #tpu.memory_space<vmem>>, %arg3: memref<8x1xf32, #tpu.memory_space<vmem>>, %arg4: memref<8x1xf32, #tpu.memory_space<vmem>>, %arg5: memref<8x256xf32, #tpu.memory_space<vmem>>) attributes {dimension_semantics = [#tpu.dimension_semantics<parallel>, #tpu.dimension_semantics<parallel>], iteration_bounds = array<i64: 1, 1>, scalar_prefetch = 0 : i64, scratch_operands = 0 : i64, tpu.core_type = #tpu.core_type<tc>, window_params = [{transform_indices = @transform_0, window_bounds = array<i64: 8, 256>}, {transform_indices = @transform_1, window_bounds = array<i64: 8, 1>}, {transform_indices = @transform_2, window_bounds = array<i64: 8, 1>}, {transform_indices = @transform_3, window_bounds = array<i64: 8, 256>}]} {
    %c0 = arith.constant 0 : index
    %c0_0 = arith.constant 0 : index
    %0 = vector.load %arg2[%c0, %c0_0] : memref<8x256xf32, #tpu.memory_space<vmem>>, vector<8x256xf32>
    %c0_1 = arith.constant 0 : index
    %c0_2 = arith.constant 0 : index
    %1 = vector.load %arg3[%c0_1, %c0_2] : memref<8x1xf32, #tpu.memory_space<vmem>>, vector<8x1xf32>
    %2 = vector.broadcast %1 : vector<8x1xf32> to vector<8x256xf32>
    %3 = arith.mulf %0, %2 : vector<8x256xf32>
    %c0_3 = arith.constant 0 : index
    %c0_4 = arith.constant 0 : index
    %4 = vector.load %arg4[%c0_3, %c0_4] : memref<8x1xf32, #tpu.memory_space<vmem>>, vector<8x1xf32>
    %5 = vector.broadcast %4 : vector<8x1xf32> to vector<8x256xf32>
    %6 = arith.addf %3, %5 : vector<8x256xf32>
    %cst = arith.constant 0.000000e+00 : f32
    %7 = vector.broadcast %cst : f32 to vector<8x256xf32>
    %8 = arith.maximumf %6, %7 : vector<8x256xf32>
    %c0_5 = arith.constant 0 : index
    %c0_6 = arith.constant 0 : index
    %9 = vector.load %arg5[%c0_5, %c0_6] : memref<8x256xf32, #tpu.memory_space<vmem>>, vector<8x256xf32>
    tpu.vector_store %arg5[%c0_5, %c0_6], %8 {strides = array<i32>} : memref<8x256xf32, #tpu.memory_space<vmem>>, vector<8x256xf32>,
    return
  }
  func.func @transform_0(%arg0: i32, %arg1: i32) -> (i32, i32) {
    %c0_i32 = arith.constant 0 : i32
    return %arg0, %arg1 : i32, i32
  }
  func.func @transform_1(%arg0: i32, %arg1: i32) -> (i32, i32) {
    %c0_i32 = arith.constant 0 : i32
    %c0_i32_0 = arith.constant 0 : i32
    return %arg0, %c0_i32 : i32, i32
  }
  func.func @transform_2(%arg0: i32, %arg1: i32) -> (i32, i32) {
    %c0_i32 = arith.constant 0 : i32
    %c0_i32_0 = arith.constant 0 : i32
    return %arg0, %c0_i32 : i32, i32
  }
  func.func @transform_3(%arg0: i32, %arg1: i32) -> (i32, i32) {
    %c0_i32 = arith.constant 0 : i32
    return %arg0, %arg1 : i32, i32
  }
}

</mosaic_0001>

<llo_original>
// kernel: tpu_custom_call.1
$region0: #{tpu_custom_call.1}
  #allocation0 [shape = 'u32[]', space=smem, size = 0x4, offset = 0x4, fixed_abs, tag = 'smem constant byte address 0x4 - core index']
  #allocation1 [shape = 'u32[72,128]{1,0:T(1,128)}', space=vmem, size = 0x9000, scoped, tag = 'internal scratch']
  %s0 = inlined_call_operand.vmem [shape: f32[8,256], index: 0, kind: input, shape index: {}]
  %s1 = inlined_call_operand.vmem [shape: f32[8,1], index: 1, kind: input, shape index: {}]
  %s2 = inlined_call_operand.vmem [shape: f32[8,1], index: 2, kind: input, shape index: {}]
  %s3 = inlined_call_operand.hbm [shape: f32[8,256], index: 3, kind: output, shape index: {}]
  %s4 = sld [smem:[#allocation0]]
  $region22: #{tpu_custom_call.1} parent=0
    _
  %s6 = ssub.s32 1, %s4
  %s7 = scalar_select 0, %s6, %s4
  $region1: #{tpu_custom_call.1} parent=0
    #allocation2 [shape = 'u8[8192]{0}', space=vmem, size = 0x2000, scoped, tag = 'output window, operand 0, single buffered']
    #allocation3 [shape = 's32[1]{0}', space=sflag, size = 0x4, scoped, tag = 'scoped memory for tpu_custom_call.1']
    %8 = vsyncpa [#allocation3], 0
    // Predicated region
    $region2: #{tpu_custom_call.1} parent=1 // pred_check
      _
    $region3: #{tpu_custom_call.1} parent=1 // pred_check_branch
      %10 = sbr.rel (0) target = $region5
    $region4: #{tpu_custom_call.1} parent=1 // pred_region
      _
    $region5: #{tpu_custom_call.1} parent=1 // pred_fallthru
      _
    // Predicated region
    $region6: #{tpu_custom_call.1} parent=1 // pred_check
      _
    $region7: #{tpu_custom_call.1} parent=1 // pred_check_branch
      %12 = sbr.rel (0) target = $region9
    $region8: #{tpu_custom_call.1} parent=1 // pred_region
      _
    $region9: #{tpu_custom_call.1} parent=1 // pred_fallthru
      _
    // Predicated region
    $region10: #{tpu_custom_call.1} parent=1 // pred_check
      _
    $region11: #{tpu_custom_call.1} parent=1 // pred_check_branch
      %14 = sbr.rel (0) target = $region13
    $region12: #{tpu_custom_call.1} parent=1 // pred_region
      _
    $region13: #{tpu_custom_call.1} parent=1 // pred_fallthru
      _
    %v15 = vld [vmem:[%s0] sm:$0xff]
    %v16 = vld [vmem:[%s0 + $0x8] sm:$0xff]
    %v17 = vld [vmem:[%s1] sm:$0xff]
    %19 = vset.pattern.permute.xlu0 0
    %20 = vperm.xlu0 %19, %v17
    %v21 = vpop.permute.xlu0 %20
    %v23 = vmul.f32 %v15, %v21
    %v24 = vmul.f32 %v16, %v21
    %v25 = vld [vmem:[%s2] sm:$0xff]
    %27 = vset.pattern.permute.xlu0 0
    %28 = vperm.xlu0 %27, %v25
    %v29 = vpop.permute.xlu0 %28
    %v31 = vadd.f32 %v23, %v29
    %v32 = vadd.f32 %v24, %v29
    %v33 = vmax.f32 %v31, 0.0
    %v34 = vmax.f32 %v32, 0.0
    %35 = vst [vmem:[#allocation2] sm:$0xff] %v33
    %36 = vst [vmem:[#allocation2 + $0x8] sm:$0xff] %v34
    // Predicated region
    $region14: #{tpu_custom_call.1} parent=1 // pred_check
      _
    $region15: #{tpu_custom_call.1} parent=1 // pred_check_branch
      %38 = sbr.rel (0) target = $region17
    $region16: #{tpu_custom_call.1} parent=1 // pred_region
      %40 = vsyncadd [#allocation3], 0
      %s42 = sshll.u32 [#allocation2], 4
      %s43 = int_to_ptr.vmem [resolvable:$true] %s42
      %s44 = sshll.u32 %s3, 4
      %s45 = int_to_ptr.hbm [resolvable:$true] %s44
      %47 = dma.vmem_to_hbm [thread:$0]  %s43, 256, %s45, [#allocation3]
    $region17: #{tpu_custom_call.1} parent=1 // pred_fallthru
      _
    // Predicated region
    $region18: #{tpu_custom_call.1} parent=1 // pred_check
      _
    $region19: #{tpu_custom_call.1} parent=1 // pred_check_branch
      %49 = sbr.rel (0) target = $region21
    $region20: #{tpu_custom_call.1} parent=1 // pred_region
      %51 = dma.done [#allocation3], 256
    $region21: #{tpu_custom_call.1} parent=1 // pred_fallthru
      _
    %52 = vsyncpa [#allocation3], 1

</llo_original>
